<compile_context>
chip_gen: v6e
topology: v6e:2x2x1
jax: 0.10.0
libtpu: 0.0.40
codegen_flags: <defaults>
</compile_context>

<pallas_src>
import functools
import math

import numpy as np
import jax
import jax.numpy as jnp
from jax import lax
from jax.experimental import pallas as pl
from jax.experimental.pallas import tpu as pltpu


# ----------------------------- Pallas kernel --------------------------------

def _ccritic_fused_kernel(x_ref, lab_ref, bias_ref, w1x_ref, w_ref, o_ref, *,
                          slope, class_size):
    """Whole CCritic forward: 6 chained MXU matmuls, all operands in VMEM.

    x_ref    : (bm, Kx)           f32   flattened input rows (features*L)
    lab_ref  : (bm, 1)            i32   class labels
    bias_ref : (class_size+5, D)  f32   rows [0:cs]   = per-class conv1 row
                                         (embedding branch + b1, folded at init)
                                         rows [cs:cs+5] = biases of conv2..4,
                                         fc, fc2 (zero padded to D lanes)
    w1x_ref  : (Kx, D)            bf16  folded conv1 weight (x channels only)
    w_ref    : (5, D, D)          bf16  folded conv2..4, fc, fc2 (zero padded)
    o_ref    : (bm, D)            f32   lane-dense output; column 0 = validity
    """

    def lrelu(a):                               # valid for 0 <= slope < 1
        return jnp.maximum(a, slope * a)

    def mxu(a, w_bf16):                         # bf16 operands, f32 accumulate
        return jnp.dot(a.astype(jnp.bfloat16), w_bf16,
                       preferred_element_type=jnp.float32)

    biases = bias_ref[...]                      # (cs + 5, D) f32
    lab = lab_ref[...]                          # (bm, 1) i32
    bm = lab.shape[0]

    # conv1 per-class contribution (embedding branch + bias, folded at init).
    # class_size is small & static -> a few VPU select/madd ops, no MXU matmul.
    contrib = jnp.zeros((bm, biases.shape[1]), jnp.float32)
    for c in range(class_size):
        sel = jnp.where(lab == c, 1.0, 0.0)                 # (bm, 1) f32
        contrib = contrib + sel * biases[c:c + 1, :]        # (bm, D)

    h = lrelu(mxu(x_ref[...], w1x_ref[...]) + contrib)      # conv1 + LeakyReLU
    for j in range(4):                                      # conv2..4, fc
        h = lrelu(mxu(h, w_ref[j])
                  + biases[class_size + j:class_size + j + 1, :])
    # fc2 (identity activation); output lane-padded to D, column 0 is validity.
    o_ref[...] = mxu(h, w_ref[4]) + biases[class_size + 4:class_size + 5, :]


# --------------------------- init-time preprocessing -------------------------

def _fold_conv1d(w, b, l_in, stride, padding, dilation):
    """Fold a Conv1d (PyTorch cross-correlation, zero padding) into a matmul.

    Returns (W_big, b_big, l_out) such that for x flattened channel-major
    (index ci*l_in + l) and y flattened channel-major (index co*l_out + lo):
        y_flat = x_flat @ W_big + b_big
    """
    w = np.asarray(w, np.float32)
    b = np.asarray(b, np.float32)
    c_out, c_in, k_size = w.shape
    l_out = (l_in + 2 * padding - dilation * (k_size - 1) - 1) // stride + 1
    W = np.zeros((c_in * l_in, c_out * l_out), np.float32)
    for lo in range(l_out):
        for k in range(k_size):
            l = lo * stride + k * dilation - padding
            if 0 <= l < l_in:
                # rows {ci*l_in + l}, cols {co*l_out + lo}
                W[l::l_in, lo::l_out] += w[:, :, k].T
    b_big = np.repeat(b, l_out)[None, :].astype(np.float32)   # (1, c_out*l_out)
    return W, b_big, l_out


def spectral_normalize(w, key, n_iter=10, eps=1e-12):
    """Mimics torch.nn.utils.spectral_norm(n_power_iterations=10) on Conv1d weight.
    # TODO(synk): torch updates u/v per training forward; here it is applied once at init.
    """
    mat = w.reshape(w.shape[0], -1)
    u = jax.random.normal(key, (mat.shape[0],), jnp.float32)
    u = u / (jnp.linalg.norm(u) + eps)
    v = jnp.zeros((mat.shape[1],), jnp.float32)
    for _ in range(n_iter):
        v = mat.T @ u
        v = v / (jnp.linalg.norm(v) + eps)
        u = mat @ v
        u = u / (jnp.linalg.norm(u) + eps)
    sigma = u @ (mat @ v)
    return w / sigma


def _round_bf16(a):
    """Round f32 weights to bf16 once so kernel (bf16) and f32 reference agree."""
    return jnp.asarray(a, jnp.bfloat16).astype(jnp.float32)


def _pad2(a, rows, cols):
    a = np.asarray(a, np.float32)
    out = np.zeros((rows, cols), np.float32)
    out[:a.shape[0], :a.shape[1]] = a
    return out


# ------------------------------- CCritic -------------------------------------

class CCriticPallas:
    def __init__(self, params, class_size=2, key=jax.random.PRNGKey(42)):
        self.input_shape = params['input_shape']
        self.features = self.input_shape[0]
        self.relu_slope = 0.2
        self.stride = params['stride']
        self.kernel_size = params['kernel_size']
        self.padding = params['padding']
        self.dilation = params['dilation']
        self.class_size = class_size
        self.embedding_dim = self.input_shape[1]
        # NOTE: drop_rate exists in the PyTorch module but is never used in forward.

        keys = jax.random.split(key, 16)
        channels = [self.features + 1, 16, 32, 64, 128]
        self.conv_w, self.conv_b = [], []
        for i in range(4):
            cin, cout = channels[i], channels[i + 1]
            w = 0.1 * jax.random.normal(keys[i], (cout, cin, self.kernel_size),
                                        jnp.float32)
            w = spectral_normalize(w, keys[4 + i], n_iter=10)
            # kernel runs bf16 weights; keep identical values in f32 reference.
            w = _round_bf16(w)
            b = 0.01 * jax.random.normal(keys[8 + i], (cout,), jnp.float32)
            self.conv_w.append(w)
            self.conv_b.append(b)

        self.embedding_table = 0.1 * jax.random.normal(
            keys[12], (class_size, self.embedding_dim), jnp.float32)

        # ----- fold the conv stack into dense matmuls (once, at init) --------
        L = self.embedding_dim
        folded_w, folded_b, lengths = [], [], [L]
        for w, b in zip(self.conv_w, self.conv_b):
            Wb, bb, L = _fold_conv1d(np.asarray(w), np.asarray(b), L,
                                     self.stride, self.padding, self.dilation)
            folded_w.append(Wb)
            folded_b.append(bb)
            lengths.append(L)
        l_final = lengths[-1]

        ds_size = int(math.ceil(self.input_shape[1] / 2 ** 4))
        assert 128 * ds_size == 128 * l_final, "fc input dim mismatch (as in PyTorch)"

        self.fc_w = _round_bf16(0.1 * jax.random.normal(
            keys[13], (128 * ds_size, 64), jnp.float32))
        self.fc_b = 0.01 * jax.random.normal(keys[14], (64,), jnp.float32)
        self.fc2_w = _round_bf16(0.1 * jax.random.normal(
            keys[15], (64, 1), jnp.float32))
        # TODO(synk): fc2 bias is zero-init here vs torch's default uniform init.
        self.fc2_b = jnp.zeros((1,), jnp.float32)

        # ----- pack everything into lane-padded slabs (once, at init) --------
        kx = self.features * self.embedding_dim          # rows of conv1 x-part
        dims = [folded_w[0].shape[1]]
        for Wm in folded_w[1:]:
            dims += list(Wm.shape)
        dims += [self.fc_w.shape[0], self.fc_w.shape[1], self.fc2_w.shape[0], 1]
        D = max(128, int(-(-max(dims) // 128) * 128))     # common padded width

        w1 = folded_w[0]                                  # ((features+1)*L, n1)
        w1x = w1[:kx]                                     # x channels
        w1e = w1[kx:]                                     # embedding channel
        b1 = folded_b[0]                                  # (1, n1)
        # Per-class conv1 contribution (embedding branch + bias) as an additive row.
        emb_np = np.asarray(self.embedding_table, np.float32)
        contrib = emb_np @ w1e + b1                       # (class_size, n1)

        w1x_p = jnp.asarray(_pad2(w1x, kx, D), jnp.bfloat16)            # (kx, D)
        w_slab = jnp.asarray(np.stack([
            _pad2(folded_w[1], D, D),
            _pad2(folded_w[2], D, D),
            _pad2(folded_w[3], D, D),
            _pad2(np.asarray(self.fc_w), D, D),
            _pad2(np.asarray(self.fc2_w), D, D),
        ]), jnp.bfloat16)                                                # (5, D, D)
        bias_slab = jnp.asarray(np.stack(
            [_pad2(contrib[c:c + 1], 1, D)[0] for c in range(class_size)]
            + [_pad2(folded_b[1], 1, D)[0],
               _pad2(folded_b[2], 1, D)[0],
               _pad2(folded_b[3], 1, D)[0],
               _pad2(np.asarray(self.fc_b)[None, :], 1, D)[0],
               _pad2(np.asarray(self.fc2_b)[None, :], 1, D)[0]]
        ), jnp.float32)                                                  # (cs+5, D)

        slope = float(self.relu_slope)
        cs = int(class_size)
        kernel = functools.partial(_ccritic_fused_kernel,
                                   slope=slope, class_size=cs)

        def fused_call(x_flat, labels):
            B = x_flat.shape[0]
            bm = B
            for cand in (256, 128):   # shard rows across TCs at training batch sizes
                if B >= cand and B % cand == 0:
                    bm = cand
                    break
            grid = (B // bm,)
            return pl.pallas_call(
                kernel,
                out_shape=jax.ShapeDtypeStruct((B, D), jnp.float32),
                grid=grid,
                in_specs=[
                    pl.BlockSpec((bm, kx), lambda i: (i, 0)),        # x rows
                    pl.BlockSpec((bm, 1), lambda i: (i, 0)),         # labels
                    pl.BlockSpec((cs + 5, D), lambda i: (0, 0)),     # bias/contrib slab
                    pl.BlockSpec((kx, D), lambda i: (0, 0)),         # conv1 (x part)
                    pl.BlockSpec((5, D, D), lambda i: (0, 0, 0)),    # packed weights
                ],
                out_specs=pl.BlockSpec((bm, D), lambda i: (i, 0)),
                compiler_params=pltpu.CompilerParams(
                    dimension_semantics=("parallel",)),
            )(x_flat, labels, bias_slab, w1x_p, w_slab)

        def forward(x, label):
            if x.ndim == 2:
                x = x.reshape(x.shape[0], 1, -1)
            B = x.shape[0]
            # Contiguous reshapes are free bitcasts; no gather/pad fusion remains
            # outside the single Pallas kernel.
            x_flat = x.reshape(B, -1).astype(jnp.float32)     # (B, features*L)
            labels = label.reshape(B, 1).astype(jnp.int32)    # (B, 1)
            out = fused_call(x_flat, labels)                  # (B, D) lane-dense
            return out[:, :1]                                 # (B, 1) validity

        self._forward = jax.jit(forward)

    def __call__(self, x, label):
        return self._forward(x, label)

    # Pure-JAX (no Pallas) reference, used only for the correctness check.
    def reference_forward(self, x, label):
        emb = jnp.take(self.embedding_table, label.reshape(-1), axis=0)[:, None, :]
        if x.ndim == 2:
            x = x.reshape(x.shape[0], 1, -1)
        h = jnp.concatenate([x, emb], axis=1)
        for w, b in zip(self.conv_w, self.conv_b):
            h = lax.conv_general_dilated(
                h, w, window_strides=(self.stride,),
                padding=[(self.padding, self.padding)],
                rhs_dilation=(self.dilation,),
                dimension_numbers=('NCH', 'OIH', 'NCH'))
            h = h + b[None, :, None]
            h = jnp.where(h >= 0, h, self.relu_slope * h)
        h = h.reshape(h.shape[0], -1)
        f = h @ self.fc_w + self.fc_b
        f = jnp.where(f >= 0, f, self.relu_slope * f)
        return f @ self.fc2_w + self.fc2_b


if __name__ == "__main__":
    params = dict(input_shape=(4, 16), drop_rate=0.25,
                  stride=2, kernel_size=3, padding=1, dilation=1)
    critic = CCriticPallas(params, class_size=2, key=jax.random.PRNGKey(42))

    key = jax.random.PRNGKey(0)
    kx_, kl_ = jax.random.split(key)
    x = jax.random.normal(kx_, (2, 4, 16), jnp.float32)      # (B, features, seq_len)
    label = jax.random.randint(kl_, (2, 1), 0, 2)            # (B, 1) class ids

    validity = critic(x, label)
    jax.block_until_ready(validity)
    assert validity.shape == (2, 1) and validity.dtype == jnp.float32

    # Correctness check against a plain-JAX f32 reference of the original module
    # (kernel uses bf16 matmul operands with f32 accumulation -> loose tolerance).
    ref = critic.reference_forward(x, label)
    np.testing.assert_allclose(np.asarray(validity), np.asarray(ref),
                               rtol=5e-2, atol=5e-2)
    print("KERNEL_OK")
</pallas_src>

<mosaic_0001>
module attributes {stable_mosaic.version = 11 : i64} {
  func.func @_ccritic_fused_kernel(%arg0: i32, %arg1: memref<2x64xf32, #tpu.memory_space<vmem>>, %arg2: memref<2x1xi32, #tpu.memory_space<vmem>>, %arg3: memref<7x128xf32, #tpu.memory_space<vmem>>, %arg4: memref<64x128xbf16, #tpu.memory_space<vmem>>, %arg5: memref<5x128x128xbf16, #tpu.memory_space<vmem>>, %arg6: memref<2x128xf32, #tpu.memory_space<vmem>>) attributes {dimension_semantics = [#tpu.dimension_semantics<parallel>], iteration_bounds = array<i64: 1>, scalar_prefetch = 0 : i64, scratch_operands = 0 : i64, tpu.core_type = #tpu.core_type<tc>, window_params = [{transform_indices = @transform_0, window_bounds = array<i64: 2, 64>}, {transform_indices = @transform_1, window_bounds = array<i64: 2, 1>}, {pipeline_mode = #tpu.pipeline_mode<synchronous>, transform_indices = @transform_2, window_bounds = array<i64: 7, 128>}, {pipeline_mode = #tpu.pipeline_mode<synchronous>, transform_indices = @transform_3, window_bounds = array<i64: 64, 128>}, {pipeline_mode = #tpu.pipeline_mode<synchronous>, transform_indices = @transform_4, window_bounds = array<i64: 5, 128, 128>}, {transform_indices = @transform_5, window_bounds = array<i64: 2, 128>}]} {
    %c0 = arith.constant 0 : index
    %c0_0 = arith.constant 0 : index
    %0 = vector.load %arg3[%c0, %c0_0] : memref<7x128xf32, #tpu.memory_space<vmem>>, vector<7x128xf32>
    %c0_1 = arith.constant 0 : index
    %c0_2 = arith.constant 0 : index
    %1 = vector.load %arg2[%c0_1, %c0_2] : memref<2x1xi32, #tpu.memory_space<vmem>>, vector<2x1xi32>
    %cst = arith.constant 0.000000e+00 : f32
    %2 = vector.broadcast %cst : f32 to vector<2x128xf32>
    %c0_i32 = arith.constant 0 : i32
    %3 = vector.broadcast %c0_i32 : i32 to vector<2x1xi32>
    %4 = arith.cmpi eq, %1, %3 : vector<2x1xi32>
    %cst_3 = arith.constant 1.000000e+00 : f32
    %cst_4 = arith.constant 0.000000e+00 : f32
    %5 = vector.broadcast %cst_3 : f32 to vector<2x1xf32>
    %6 = vector.broadcast %cst_4 : f32 to vector<2x1xf32>
    %7 = arith.select %4, %5, %6 : vector<2x1xi1>, vector<2x1xf32>
    %8 = vector.extract_strided_slice %0 {offsets = [0, 0], sizes = [1, 128], strides = [1, 1]} : vector<7x128xf32> to vector<1x128xf32>
    %9 = vector.broadcast %7 : vector<2x1xf32> to vector<2x128xf32>
    %10 = vector.broadcast %8 : vector<1x128xf32> to vector<2x128xf32>
    %11 = arith.mulf %9, %10 : vector<2x128xf32>
    %12 = arith.addf %2, %11 : vector<2x128xf32>
    %c1_i32 = arith.constant 1 : i32
    %13 = vector.broadcast %c1_i32 : i32 to vector<2x1xi32>
    %14 = arith.cmpi eq, %1, %13 : vector<2x1xi32>
    %cst_5 = arith.constant 1.000000e+00 : f32
    %cst_6 = arith.constant 0.000000e+00 : f32
    %15 = vector.broadcast %cst_5 : f32 to vector<2x1xf32>
    %16 = vector.broadcast %cst_6 : f32 to vector<2x1xf32>
    %17 = arith.select %14, %15, %16 : vector<2x1xi1>, vector<2x1xf32>
    %18 = vector.extract_strided_slice %0 {offsets = [1, 0], sizes = [1, 128], strides = [1, 1]} : vector<7x128xf32> to vector<1x128xf32>
    %19 = vector.broadcast %17 : vector<2x1xf32> to vector<2x128xf32>
    %20 = vector.broadcast %18 : vector<1x128xf32> to vector<2x128xf32>
    %21 = arith.mulf %19, %20 : vector<2x128xf32>
    %22 = arith.addf %12, %21 : vector<2x128xf32>
    %c0_7 = arith.constant 0 : index
    %c0_8 = arith.constant 0 : index
    %23 = vector.load %arg1[%c0_7, %c0_8] : memref<2x64xf32, #tpu.memory_space<vmem>>, vector<2x64xf32>
    %c0_9 = arith.constant 0 : index
    %c0_10 = arith.constant 0 : index
    %24 = vector.load %arg4[%c0_9, %c0_10] : memref<64x128xbf16, #tpu.memory_space<vmem>>, vector<64x128xbf16>
    %25 = arith.truncf %23 : vector<2x64xf32> to vector<2x64xbf16>
    %cst_11 = arith.constant dense<0.000000e+00> : vector<2x128xf32>
    %26 = tpu.matmul %25, %24, %cst_11 {dimension_numbers = #tpu.dot_dimension_numbers<[1], [0], [0], [1], [0, 0, 1, 1], [], []>} : vector<2x64xbf16>, vector<64x128xbf16>, vector<2x128xf32> -> vector<2x128xf32>
    %27 = arith.addf %26, %22 : vector<2x128xf32>
    %cst_12 = arith.constant 2.000000e-01 : f32
    %28 = vector.broadcast %cst_12 : f32 to vector<2x128xf32>
    %29 = arith.mulf %28, %27 : vector<2x128xf32>
    %30 = arith.maximumf %27, %29 : vector<2x128xf32>
    %c0_13 = arith.constant 0 : index
    %c0_14 = arith.constant 0 : index
    %c0_15 = arith.constant 0 : index
    %31 = vector.load %arg5[%c0_13, %c0_14, %c0_15] : memref<5x128x128xbf16, #tpu.memory_space<vmem>>, vector<1x128x128xbf16>
    %32 = vector.shape_cast %31 : vector<1x128x128xbf16> to vector<128x128xbf16>
    %33 = arith.truncf %30 : vector<2x128xf32> to vector<2x128xbf16>
    %cst_16 = arith.constant dense<0.000000e+00> : vector<2x128xf32>
    %34 = tpu.matmul %33, %32, %cst_16 {dimension_numbers = #tpu.dot_dimension_numbers<[1], [0], [0], [1], [0, 0, 1, 1], [], []>} : vector<2x128xbf16>, vector<128x128xbf16>, vector<2x128xf32> -> vector<2x128xf32>
    %35 = vector.extract_strided_slice %0 {offsets = [2, 0], sizes = [1, 128], strides = [1, 1]} : vector<7x128xf32> to vector<1x128xf32>
    %36 = vector.broadcast %35 : vector<1x128xf32> to vector<2x128xf32>
    %37 = arith.addf %34, %36 : vector<2x128xf32>
    %cst_17 = arith.constant 2.000000e-01 : f32
    %38 = vector.broadcast %cst_17 : f32 to vector<2x128xf32>
    %39 = arith.mulf %38, %37 : vector<2x128xf32>
    %40 = arith.maximumf %37, %39 : vector<2x128xf32>
    %c1 = arith.constant 1 : index
    %c0_18 = arith.constant 0 : index
    %c0_19 = arith.constant 0 : index
    %41 = vector.load %arg5[%c1, %c0_18, %c0_19] : memref<5x128x128xbf16, #tpu.memory_space<vmem>>, vector<1x128x128xbf16>
    %42 = vector.shape_cast %41 : vector<1x128x128xbf16> to vector<128x128xbf16>
    %43 = arith.truncf %40 : vector<2x128xf32> to vector<2x128xbf16>
    %cst_20 = arith.constant dense<0.000000e+00> : vector<2x128xf32>
    %44 = tpu.matmul %43, %42, %cst_20 {dimension_numbers = #tpu.dot_dimension_numbers<[1], [0], [0], [1], [0, 0, 1, 1], [], []>} : vector<2x128xbf16>, vector<128x128xbf16>, vector<2x128xf32> -> vector<2x128xf32>
    %45 = vector.extract_strided_slice %0 {offsets = [3, 0], sizes = [1, 128], strides = [1, 1]} : vector<7x128xf32> to vector<1x128xf32>
    %46 = vector.broadcast %45 : vector<1x128xf32> to vector<2x128xf32>
    %47 = arith.addf %44, %46 : vector<2x128xf32>
    %cst_21 = arith.constant 2.000000e-01 : f32
    %48 = vector.broadcast %cst_21 : f32 to vector<2x128xf32>
    %49 = arith.mulf %48, %47 : vector<2x128xf32>
    %50 = arith.maximumf %47, %49 : vector<2x128xf32>
    %c2 = arith.constant 2 : index
    %c0_22 = arith.constant 0 : index
    %c0_23 = arith.constant 0 : index
    %51 = vector.load %arg5[%c2, %c0_22, %c0_23] : memref<5x128x128xbf16, #tpu.memory_space<vmem>>, vector<1x128x128xbf16>
    %52 = vector.shape_cast %51 : vector<1x128x128xbf16> to vector<128x128xbf16>
    %53 = arith.truncf %50 : vector<2x128xf32> to vector<2x128xbf16>
    %cst_24 = arith.constant dense<0.000000e+00> : vector<2x128xf32>
    %54 = tpu.matmul %53, %52, %cst_24 {dimension_numbers = #tpu.dot_dimension_numbers<[1], [0], [0], [1], [0, 0, 1, 1], [], []>} : vector<2x128xbf16>, vector<128x128xbf16>, vector<2x128xf32> -> vector<2x128xf32>
    %55 = vector.extract_strided_slice %0 {offsets = [4, 0], sizes = [1, 128], strides = [1, 1]} : vector<7x128xf32> to vector<1x128xf32>
    %56 = vector.broadcast %55 : vector<1x128xf32> to vector<2x128xf32>
    %57 = arith.addf %54, %56 : vector<2x128xf32>
    %cst_25 = arith.constant 2.000000e-01 : f32
    %58 = vector.broadcast %cst_25 : f32 to vector<2x128xf32>
    %59 = arith.mulf %58, %57 : vector<2x128xf32>
    %60 = arith.maximumf %57, %59 : vector<2x128xf32>
    %c3 = arith.constant 3 : index
    %c0_26 = arith.constant 0 : index
    %c0_27 = arith.constant 0 : index
    %61 = vector.load %arg5[%c3, %c0_26, %c0_27] : memref<5x128x128xbf16, #tpu.memory_space<vmem>>, vector<1x128x128xbf16>
    %62 = vector.shape_cast %61 : vector<1x128x128xbf16> to vector<128x128xbf16>
    %63 = arith.truncf %60 : vector<2x128xf32> to vector<2x128xbf16>
    %cst_28 = arith.constant dense<0.000000e+00> : vector<2x128xf32>
    %64 = tpu.matmul %63, %62, %cst_28 {dimension_numbers = #tpu.dot_dimension_numbers<[1], [0], [0], [1], [0, 0, 1, 1], [], []>} : vector<2x128xbf16>, vector<128x128xbf16>, vector<2x128xf32> -> vector<2x128xf32>
    %65 = vector.extract_strided_slice %0 {offsets = [5, 0], sizes = [1, 128], strides = [1, 1]} : vector<7x128xf32> to vector<1x128xf32>
    %66 = vector.broadcast %65 : vector<1x128xf32> to vector<2x128xf32>
    %67 = arith.addf %64, %66 : vector<2x128xf32>
    %cst_29 = arith.constant 2.000000e-01 : f32
    %68 = vector.broadcast %cst_29 : f32 to vector<2x128xf32>
    %69 = arith.mulf %68, %67 : vector<2x128xf32>
    %70 = arith.maximumf %67, %69 : vector<2x128xf32>
    %c4 = arith.constant 4 : index
    %c0_30 = arith.constant 0 : index
    %c0_31 = arith.constant 0 : index
    %71 = vector.load %arg5[%c4, %c0_30, %c0_31] : memref<5x128x128xbf16, #tpu.memory_space<vmem>>, vector<1x128x128xbf16>
    %72 = vector.shape_cast %71 : vector<1x128x128xbf16> to vector<128x128xbf16>
    %73 = arith.truncf %70 : vector<2x128xf32> to vector<2x128xbf16>
    %cst_32 = arith.constant dense<0.000000e+00> : vector<2x128xf32>
    %74 = tpu.matmul %73, %72, %cst_32 {dimension_numbers = #tpu.dot_dimension_numbers<[1], [0], [0], [1], [0, 0, 1, 1], [], []>} : vector<2x128xbf16>, vector<128x128xbf16>, vector<2x128xf32> -> vector<2x128xf32>
    %75 = vector.extract_strided_slice %0 {offsets = [6, 0], sizes = [1, 128], strides = [1, 1]} : vector<7x128xf32> to vector<1x128xf32>
    %76 = vector.broadcast %75 : vector<1x128xf32> to vector<2x128xf32>
    %77 = arith.addf %74, %76 : vector<2x128xf32>
    %c0_33 = arith.constant 0 : index
    %c0_34 = arith.constant 0 : index
    %78 = vector.load %arg6[%c0_33, %c0_34] : memref<2x128xf32, #tpu.memory_space<vmem>>, vector<2x128xf32>
    tpu.vector_store %arg6[%c0_33, %c0_34], %77 {strides = array<i32>} : memref<2x128xf32, #tpu.memory_space<vmem>>, vector<2x128xf32>,
    return
  }
  func.func @transform_0(%arg0: i32) -> (i32, i32) {
    %c0_i32 = arith.constant 0 : i32
    %c0_i32_0 = arith.constant 0 : i32
    return %arg0, %c0_i32 : i32, i32
  }
  func.func @transform_1(%arg0: i32) -> (i32, i32) {
    %c0_i32 = arith.constant 0 : i32
    %c0_i32_0 = arith.constant 0 : i32
    return %arg0, %c0_i32 : i32, i32
  }
  func.func @transform_2(%arg0: i32) -> (i32, i32) {
    %c0_i32 = arith.constant 0 : i32
    %c0_i32_0 = arith.constant 0 : i32
    %c0_i32_1 = arith.constant 0 : i32
    return %c0_i32, %c0_i32_0 : i32, i32
  }
  func.func @transform_3(%arg0: i32) -> (i32, i32) {
    %c0_i32 = arith.constant 0 : i32
    %c0_i32_0 = arith.constant 0 : i32
    %c0_i32_1 = arith.constant 0 : i32
    return %c0_i32, %c0_i32_0 : i32, i32
  }
  func.func @transform_4(%arg0: i32) -> (i32, i32, i32) {
    %c0_i32 = arith.constant 0 : i32
    %c0_i32_0 = arith.constant 0 : i32
    %c0_i32_1 = arith.constant 0 : i32
    %c0_i32_2 = arith.constant 0 : i32
    return %c0_i32, %c0_i32_0, %c0_i32_1 : i32, i32, i32
  }
  func.func @transform_5(%arg0: i32) -> (i32, i32) {
    %c0_i32 = arith.constant 0 : i32
    %c0_i32_0 = arith.constant 0 : i32
    return %arg0, %c0_i32 : i32, i32
  }
}

</mosaic_0001>

<llo_original>
// kernel: forward.1
$region0: #{forward.1}
  #allocation0 [shape = 'u32[]', space=smem, size = 0x4, offset = 0x4, fixed_abs, tag = 'smem constant byte address 0x4 - core index']
  #allocation1 [shape = 'u32[144,128]{1,0:T(1,128)}', space=vmem, size = 0x12000, scoped, tag = 'internal scratch']
  %s0 = inlined_call_operand.vmem [shape: f32[2,64], index: 0, kind: input, shape index: {}]
  %s1 = inlined_call_operand.vmem [shape: s32[2,1], index: 1, kind: input, shape index: {}]
  %s2 = inlined_call_operand.vmem [shape: f32[7,128], index: 2, kind: input, shape index: {}]
  %s3 = inlined_call_operand.hbm [shape: bf16[64,128], index: 3, kind: input, shape index: {}]
  %s4 = inlined_call_operand.hbm [shape: bf16[5,128,128], index: 4, kind: input, shape index: {}]
  %s5 = inlined_call_operand.vmem [shape: f32[2,128], index: 5, kind: output, shape index: {}]
  %s6 = sld [smem:[#allocation0]]
  $region38: #{forward.1} parent=0
    _
  %s8 = ssub.s32 1, %s6
  %s9 = scalar_select 0, %s8, %s6
  $region1: #{forward.1} parent=0
    #allocation2 [shape = 'u8[16384]{0}', space=vmem, size = 0x4000, scoped, tag = 'input window, operand 3, single buffered']
    #allocation3 [shape = 's32[1]{0}', space=sflag, size = 0x4, scoped, tag = 'scoped memory for forward.1']
    #allocation4 [shape = 'u8[163840]{0}', space=vmem, size = 0x28000, scoped, tag = 'input window, operand 4, single buffered']
    #allocation5 [shape = 's32[1]{0}', space=sflag, size = 0x4, scoped, tag = 'scoped memory for forward.1']
    %10 = vsyncpa [#allocation3], 0
    %11 = vsyncpa [#allocation5], 0
    // Predicated region
    $region2: #{forward.1} parent=1 // pred_check
      _
    $region3: #{forward.1} parent=1 // pred_check_branch
      %13 = sbr.rel (0) target = $region5
    $region4: #{forward.1} parent=1 // pred_region
      _
    $region5: #{forward.1} parent=1 // pred_fallthru
      _
    // Predicated region
    $region6: #{forward.1} parent=1 // pred_check
      _
    $region7: #{forward.1} parent=1 // pred_check_branch
      %15 = sbr.rel (0) target = $region9
    $region8: #{forward.1} parent=1 // pred_region
      _
    $region9: #{forward.1} parent=1 // pred_fallthru
      _
    // Predicated region
    $region10: #{forward.1} parent=1 // pred_check
      _
    $region11: #{forward.1} parent=1 // pred_check_branch
      %17 = sbr.rel (0) target = $region13
    $region12: #{forward.1} parent=1 // pred_region
      _
    $region13: #{forward.1} parent=1 // pred_fallthru
      _
    // Predicated region
    $region14: #{forward.1} parent=1 // pred_check
      _
    $region15: #{forward.1} parent=1 // pred_check_branch
      %19 = sbr.rel (0) target = $region17
    $region16: #{forward.1} parent=1 // pred_region
      %s21 = ssub.s32 512, 512
      %22 = vsyncadd [#allocation3], %s21
      %s23 = sshll.u32 [#allocation2], 4
      %s24 = int_to_ptr.vmem [resolvable:$true] %s23
      %29 = dma.hbm_to_vmem [thread:$0]  %s3, 512, %s24, [#allocation3], 64, 64, 4
    $region17: #{forward.1} parent=1 // pred_fallthru
      _
    // Predicated region
    $region18: #{forward.1} parent=1 // pred_check
      _
    $region19: #{forward.1} parent=1 // pred_check_branch
      %31 = sbr.rel (0) target = $region21
    $region20: #{forward.1} parent=1 // pred_region
      %s33 = ssub.s32 5120, 5120
      %34 = vsyncadd [#allocation5], %s33
      %s35 = sshll.u32 [#allocation4], 4
      %s36 = int_to_ptr.vmem [resolvable:$true] %s35
      %41 = dma.hbm_to_vmem [thread:$0]  %s4, 5120, %s36, [#allocation5], 64, 64, 4
    $region21: #{forward.1} parent=1 // pred_fallthru
      _
    // Predicated region
    $region22: #{forward.1} parent=1 // pred_check
      _
    $region23: #{forward.1} parent=1 // pred_check_branch
      %43 = sbr.rel (0) target = $region25
    $region24: #{forward.1} parent=1 // pred_region
      %44 = dma.done [#allocation3], 512
    $region25: #{forward.1} parent=1 // pred_fallthru
      _
    // Predicated region
    $region26: #{forward.1} parent=1 // pred_check
      _
    $region27: #{forward.1} parent=1 // pred_check_branch
      %46 = sbr.rel (0) target = $region29
    $region28: #{forward.1} parent=1 // pred_region
      %47 = dma.done [#allocation5], 5120
    $region29: #{forward.1} parent=1 // pred_fallthru
      _
    %v49 = vld [vmem:[%s2] sm:$0x7f]
    %v50 = vld [vmem:[%s1] sm:$0x3]
    %vm51 = vcmp.eq.s32.totalorder %v50, 0
    %v52 = vsel %vm51, 1.0, 0.0
    %54 = vset.pattern.permute.xlu0 0
    %55 = vperm.xlu0 %54, %v52
    %v56 = vpop.permute.xlu0 %55
    %v58 = vlaneseq
    %v59 = vshrl.u32 %v58, 7
    %v60 = vsub.s32 0, %v59
    %v61 = vrot.slane %v49, %v60
    %v62 = vmul.f32 %v56, %v61
    %v63 = vadd.f32 %v62, 0.0
    %vm64 = vcmp.eq.s32.totalorder %v50, 1
    %v65 = vsel %vm64, 1.0, 0.0
    %67 = vset.pattern.permute.xlu0 0
    %68 = vperm.xlu0 %67, %v65
    %v69 = vpop.permute.xlu0 %68
    %v71 = vlaneseq
    %v72 = vshrl.u32 %v71, 7
    %v73 = vsub.s32 1, %v72
    %v74 = vrot.slane %v49, %v73
    %v75 = vmul.f32 %v69, %v74
    %v76 = vadd.f32 %v63, %v75
    %v77 = vld [vmem:[%s0] sm:$0x3]
    %v78 = vld [vmem:[#allocation2] sm:$0xf]
    %v79 = vld [vmem:[#allocation2 + $0x4] sm:$0xf]
    %v80 = vld [vmem:[#allocation2 + $0x8] sm:$0xf]
    %v81 = vld [vmem:[#allocation2 + $0xc] sm:$0xf]
    %v82 = vld [vmem:[#allocation2 + $0x10] sm:$0xf]
    %v83 = vld [vmem:[#allocation2 + $0x14] sm:$0xf]
    %v84 = vld [vmem:[#allocation2 + $0x18] sm:$0xf]
    %v85 = vld [vmem:[#allocation2 + $0x1c] sm:$0xf]
    %v86 = vpack.c.bf16 %v77, %v77
    %v95 = vunpack.c.l.b16 %v78
    %v96 = vunpack.c.l.b16 %v79
    %v97 = vunpack.c.l.b16 %v80
    %v98 = vunpack.c.l.b16 %v81
    %v99 = vunpack.c.l.b16 %v82
    %v100 = vunpack.c.l.b16 %v83
    %v101 = vunpack.c.l.b16 %v84
    %v102 = vunpack.c.l.b16 %v85
    %v103 = vpack.c.b16 %v96, %v95
    %v104 = vpack.c.b16 %v98, %v97
    %v105 = vpack.c.b16 %v100, %v99
    %v106 = vpack.c.b16 %v102, %v101
    %vm111 = vcmask 523264
    %v113 = vsel %vm111, %v86, 0
    %115 = vmatprep.subr.bf16.mxu0 0
    %116 = vmatpush1.bf16.msra.mxu0 0
    %117 = vmatprep.subr.bf16.mxu0 0
    %118 = vmatpush1.bf16.msra.mxu0 0
    %119 = vmatprep.subr.bf16.mxu0 0
    %120 = vmatpush1.bf16.msra.mxu0 0
    %121 = vmatprep.subr.bf16.mxu0 0
    %122 = vmatpush1.bf16.msra.mxu0 0
    %123 = vmatprep.subr.bf16.mxu0 0
    %124 = vmatpush1.bf16.msra.mxu0 %v106
    %125 = vmatprep.subr.bf16.mxu0 0
    %126 = vmatpush1.bf16.msra.mxu0 %v105
    %127 = vmatprep.subr.bf16.mxu0 0
    %128 = vmatpush1.bf16.msra.mxu0 %v104
    %129 = vmatprep.subr.bf16.mxu0 0
    %130 = vmatpush1.bf16.msra.mxu0 %v103
    %131 = vmatprep.subr.bf16.mxu0 0
    %132 = vmatpush2.bf16.msra.mxu0 0
    %133 = vmatprep.subr.bf16.mxu0 0
    %134 = vmatpush2.bf16.msra.mxu0 0
    %135 = vmatprep.subr.bf16.mxu0 0
    %136 = vmatpush2.bf16.msra.mxu0 0
    %137 = vmatprep.subr.bf16.mxu0 0
    %138 = vmatpush2.bf16.msra.mxu0 0
    %139 = vmatprep.subr.bf16.mxu0 0
    %140 = vmatpush2.bf16.msra.mxu0 0
    %141 = vmatprep.subr.bf16.mxu0 0
    %142 = vmatpush2.bf16.msra.mxu0 0
    %143 = vmatprep.subr.bf16.mxu0 0
    %144 = vmatpush2.bf16.msra.mxu0 0
    %145 = vmatprep.subr.bf16.mxu0 0
    %146 = vmatpush2.bf16.msra.mxu0 0
    %147 = vmatprep.mubr.bf16.mxu0 0
    %148 = vmatmul.mubr.bf16.gmra.mxu0 %v113
    %v149 = vpop.f32.mrf.mxu0
    %v150 = vadd.f32 %v76, %v149
    %v151 = vpop.f32.mrf.mxu0
    %v152 = vpop.f32.mrf.mxu0
    %v153 = vpop.f32.mrf.mxu0
    %154 = vdwg.mxu0
    %v155 = vmul.f32 %v150, 0.2
    %v156 = vmax.f32 %v150, %v155
    %v157 = vld [vmem:[#allocation4] sm:$0xf]
    %v158 = vld [vmem:[#allocation4 + $0x4] sm:$0xf]
    %v159 = vld [vmem:[#allocation4 + $0x8] sm:$0xf]
    %v160 = vld [vmem:[#allocation4 + $0xc] sm:$0xf]
    %v161 = vld [vmem:[#allocation4 + $0x10] sm:$0xf]
    %v162 = vld [vmem:[#allocation4 + $0x14] sm:$0xf]
    %v163 = vld [vmem:[#allocation4 + $0x18] sm:$0xf]
    %v164 = vld [vmem:[#allocation4 + $0x1c] sm:$0xf]
    %v165 = vld [vmem:[#allocation4 + $0x20] sm:$0xf]
    %v166 = vld [vmem:[#allocation4 + $0x24] sm:$0xf]
    %v167 = vld [vmem:[#allocation4 + $0x28] sm:$0xf]
    %v168 = vld [vmem:[#allocation4 + $0x2c] sm:$0xf]
    %v169 = vld [vmem:[#allocation4 + $0x30] sm:$0xf]
    %v170 = vld [vmem:[#allocation4 + $0x34] sm:$0xf]
    %v171 = vld [vmem:[#allocation4 + $0x38] sm:$0xf]
    %v172 = vld [vmem:[#allocation4 + $0x3c] sm:$0xf]
    %v173 = vpack.c.bf16 %v156, %v156
    %v174 = vlaneseq
    %v175 = vshrl.u32 %v174, 7
    %v176 = vsub.s32 2, %v175
    %v177 = vrot.slane %v49, %v176
    %v194 = vunpack.c.l.b16 %v157
    %v195 = vunpack.c.l.b16 %v158
    %v196 = vunpack.c.l.b16 %v159
    %v197 = vunpack.c.l.b16 %v160
    %v198 = vunpack.c.l.b16 %v161
    %v199 = vunpack.c.l.b16 %v162
    %v200 = vunpack.c.l.b16 %v163
    %v201 = vunpack.c.l.b16 %v164
    %v202 = vunpack.c.l.b16 %v165
    %v203 = vunpack.c.l.b16 %v166
    %v204 = vunpack.c.l.b16 %v167
    %v205 = vunpack.c.l.b16 %v168
    %v206 = vunpack.c.l.b16 %v169
    %v207 = vunpack.c.l.b16 %v170
    %v208 = vunpack.c.l.b16 %v171
    %v209 = vunpack.c.l.b16 %v172
    %v210 = vpack.c.b16 %v195, %v194
    %v211 = vpack.c.b16 %v197, %v196
    %v212 = vpack.c.b16 %v199, %v198
    %v213 = vpack.c.b16 %v201, %v200
    %v214 = vpack.c.b16 %v203, %v202
    %v215 = vpack.c.b16 %v205, %v204
    %v216 = vpack.c.b16 %v207, %v206
    %v217 = vpack.c.b16 %v209, %v208
    %226 = vmatprep.subr.bf16.mxu0 0
    %227 = vmatpush1.bf16.msra.mxu0 %v217
    %228 = vmatprep.subr.bf16.mxu0 0
    %229 = vmatpush1.bf16.msra.mxu0 %v216
    %230 = vmatprep.subr.bf16.mxu0 0
    %231 = vmatpush1.bf16.msra.mxu0 %v215
    %232 = vmatprep.subr.bf16.mxu0 0
    %233 = vmatpush1.bf16.msra.mxu0 %v214
    %234 = vmatprep.subr.bf16.mxu0 0
    %235 = vmatpush1.bf16.msra.mxu0 %v213
    %236 = vmatprep.subr.bf16.mxu0 0
    %237 = vmatpush1.bf16.msra.mxu0 %v212
    %238 = vmatprep.subr.bf16.mxu0 0
    %239 = vmatpush1.bf16.msra.mxu0 %v211
    %240 = vmatprep.subr.bf16.mxu0 0
    %241 = vmatpush1.bf16.msra.mxu0 %v210
    %242 = vmatprep.subr.bf16.mxu0 0
    %243 = vmatpush2.bf16.msra.mxu0 0
    %244 = vmatprep.subr.bf16.mxu0 0
    %245 = vmatpush2.bf16.msra.mxu0 0
    %246 = vmatprep.subr.bf16.mxu0 0
    %247 = vmatpush2.bf16.msra.mxu0 0
    %248 = vmatprep.subr.bf16.mxu0 0
    %249 = vmatpush2.bf16.msra.mxu0 0
    %250 = vmatprep.subr.bf16.mxu0 0
    %251 = vmatpush2.bf16.msra.mxu0 0
    %252 = vmatprep.subr.bf16.mxu0 0
    %253 = vmatpush2.bf16.msra.mxu0 0
    %254 = vmatprep.subr.bf16.mxu0 0
    %255 = vmatpush2.bf16.msra.mxu0 0
    %256 = vmatprep.subr.bf16.mxu0 0
    %257 = vmatpush2.bf16.msra.mxu0 0
    %258 = vmatprep.mubr.bf16.mxu0 0
    %259 = vmatmul.mubr.bf16.gmra.mxu0 %v173
    %v260 = vpop.f32.mrf.mxu0
    %v261 = vadd.f32 %v177, %v260
    %v262 = vpop.f32.mrf.mxu0
    %v263 = vpop.f32.mrf.mxu0
    %v264 = vpop.f32.mrf.mxu0
    %265 = vdwg.mxu0
    %v266 = vmul.f32 %v261, 0.2
    %v267 = vmax.f32 %v261, %v266
    %s268 = scalar_lea.vmem [#allocation4], 64
    %v269 = vld [vmem:[%s268] sm:$0xf]
    %v270 = vld [vmem:[%s268 + $0x4] sm:$0xf]
    %v271 = vld [vmem:[%s268 + $0x8] sm:$0xf]
    %v272 = vld [vmem:[%s268 + $0xc] sm:$0xf]
    %v273 = vld [vmem:[%s268 + $0x10] sm:$0xf]
    %v274 = vld [vmem:[%s268 + $0x14] sm:$0xf]
    %v275 = vld [vmem:[%s268 + $0x18] sm:$0xf]
    %v276 = vld [vmem:[%s268 + $0x1c] sm:$0xf]
    %v277 = vld [vmem:[%s268 + $0x20] sm:$0xf]
    %v278 = vld [vmem:[%s268 + $0x24] sm:$0xf]
    %v279 = vld [vmem:[%s268 + $0x28] sm:$0xf]
    %v280 = vld [vmem:[%s268 + $0x2c] sm:$0xf]
    %v281 = vld [vmem:[%s268 + $0x30] sm:$0xf]
    %v282 = vld [vmem:[%s268 + $0x34] sm:$0xf]
    %v283 = vld [vmem:[%s268 + $0x38] sm:$0xf]
    %v284 = vld [vmem:[%s268 + $0x3c] sm:$0xf]
    %v285 = vpack.c.bf16 %v267, %v267
    %v286 = vlaneseq
    %v287 = vshrl.u32 %v286, 7
    %v288 = vsub.s32 3, %v287
    %v289 = vrot.slane %v49, %v288
    %v306 = vunpack.c.l.b16 %v269
    %v307 = vunpack.c.l.b16 %v270
    %v308 = vunpack.c.l.b16 %v271
    %v309 = vunpack.c.l.b16 %v272
    %v310 = vunpack.c.l.b16 %v273
    %v311 = vunpack.c.l.b16 %v274
    %v312 = vunpack.c.l.b16 %v275
    %v313 = vunpack.c.l.b16 %v276
    %v314 = vunpack.c.l.b16 %v277
    %v315 = vunpack.c.l.b16 %v278
    %v316 = vunpack.c.l.b16 %v279
    %v317 = vunpack.c.l.b16 %v280
    %v318 = vunpack.c.l.b16 %v281
    %v319 = vunpack.c.l.b16 %v282
    %v320 = vunpack.c.l.b16 %v283
    %v321 = vunpack.c.l.b16 %v284
    %v322 = vpack.c.b16 %v307, %v306
    %v323 = vpack.c.b16 %v309, %v308
    %v324 = vpack.c.b16 %v311, %v310
    %v325 = vpack.c.b16 %v313, %v312
    %v326 = vpack.c.b16 %v315, %v314
    %v327 = vpack.c.b16 %v317, %v316
    %v328 = vpack.c.b16 %v319, %v318
    %v329 = vpack.c.b16 %v321, %v320
    %338 = vmatprep.subr.bf16.mxu0 0
    %339 = vmatpush1.bf16.msra.mxu0 %v329
    %340 = vmatprep.subr.bf16.mxu0 0
    %341 = vmatpush1.bf16.msra.mxu0 %v328
    %342 = vmatprep.subr.bf16.mxu0 0
    %343 = vmatpush1.bf16.msra.mxu0 %v327
    %344 = vmatprep.subr.bf16.mxu0 0
    %345 = vmatpush1.bf16.msra.mxu0 %v326
    %346 = vmatprep.subr.bf16.mxu0 0
    %347 = vmatpush1.bf16.msra.mxu0 %v325
    %348 = vmatprep.subr.bf16.mxu0 0
    %349 = vmatpush1.bf16.msra.mxu0 %v324
    %350 = vmatprep.subr.bf16.mxu0 0
    %351 = vmatpush1.bf16.msra.mxu0 %v323
    %352 = vmatprep.subr.bf16.mxu0 0
    %353 = vmatpush1.bf16.msra.mxu0 %v322
    %354 = vmatprep.subr.bf16.mxu0 0
    %355 = vmatpush2.bf16.msra.mxu0 0
    %356 = vmatprep.subr.bf16.mxu0 0
    %357 = vmatpush2.bf16.msra.mxu0 0
    %358 = vmatprep.subr.bf16.mxu0 0
    %359 = vmatpush2.bf16.msra.mxu0 0
    %360 = vmatprep.subr.bf16.mxu0 0
    %361 = vmatpush2.bf16.msra.mxu0 0
    %362 = vmatprep.subr.bf16.mxu0 0
    %363 = vmatpush2.bf16.msra.mxu0 0
    %364 = vmatprep.subr.bf16.mxu0 0
    %365 = vmatpush2.bf16.msra.mxu0 0
    %366 = vmatprep.subr.bf16.mxu0 0
    %367 = vmatpush2.bf16.msra.mxu0 0
    %368 = vmatprep.subr.bf16.mxu0 0
    %369 = vmatpush2.bf16.msra.mxu0 0
    %370 = vmatprep.mubr.bf16.mxu0 0
    %371 = vmatmul.mubr.bf16.gmra.mxu0 %v285
    %v372 = vpop.f32.mrf.mxu0
    %v373 = vadd.f32 %v289, %v372
    %v374 = vpop.f32.mrf.mxu0
    %v375 = vpop.f32.mrf.mxu0
    %v376 = vpop.f32.mrf.mxu0
    %377 = vdwg.mxu0
    %v378 = vmul.f32 %v373, 0.2
    %v379 = vmax.f32 %v373, %v378
    %s380 = scalar_lea.vmem [#allocation4], 128
    %v381 = vld [vmem:[%s380] sm:$0xf]
    %v382 = vld [vmem:[%s380 + $0x4] sm:$0xf]
    %v383 = vld [vmem:[%s380 + $0x8] sm:$0xf]
    %v384 = vld [vmem:[%s380 + $0xc] sm:$0xf]
    %v385 = vld [vmem:[%s380 + $0x10] sm:$0xf]
    %v386 = vld [vmem:[%s380 + $0x14] sm:$0xf]
    %v387 = vld [vmem:[%s380 + $0x18] sm:$0xf]
    %v388 = vld [vmem:[%s380 + $0x1c] sm:$0xf]
    %v389 = vld [vmem:[%s380 + $0x20] sm:$0xf]
    %v390 = vld [vmem:[%s380 + $0x24] sm:$0xf]
    %v391 = vld [vmem:[%s380 + $0x28] sm:$0xf]
    %v392 = vld [vmem:[%s380 + $0x2c] sm:$0xf]
    %v393 = vld [vmem:[%s380 + $0x30] sm:$0xf]
    %v394 = vld [vmem:[%s380 + $0x34] sm:$0xf]
    %v395 = vld [vmem:[%s380 + $0x38] sm:$0xf]
    %v396 = vld [vmem:[%s380 + $0x3c] sm:$0xf]
    %v397 = vpack.c.bf16 %v379, %v379
    %v398 = vlaneseq
    %v399 = vshrl.u32 %v398, 7
    %v400 = vsub.s32 4, %v399
    %v401 = vrot.slane %v49, %v400
    %v418 = vunpack.c.l.b16 %v381
    %v419 = vunpack.c.l.b16 %v382
    %v420 = vunpack.c.l.b16 %v383
    %v421 = vunpack.c.l.b16 %v384
    %v422 = vunpack.c.l.b16 %v385
    %v423 = vunpack.c.l.b16 %v386
    %v424 = vunpack.c.l.b16 %v387
    %v425 = vunpack.c.l.b16 %v388
    %v426 = vunpack.c.l.b16 %v389
    %v427 = vunpack.c.l.b16 %v390
    %v428 = vunpack.c.l.b16 %v391
    %v429 = vunpack.c.l.b16 %v392
    %v430 = vunpack.c.l.b16 %v393
    %v431 = vunpack.c.l.b16 %v394
    %v432 = vunpack.c.l.b16 %v395
    %v433 = vunpack.c.l.b16 %v396
    %v434 = vpack.c.b16 %v419, %v418
    %v435 = vpack.c.b16 %v421, %v420
    %v436 = vpack.c.b16 %v423, %v422
    %v437 = vpack.c.b16 %v425, %v424
    %v438 = vpack.c.b16 %v427, %v426
    %v439 = vpack.c.b16 %v429, %v428
    %v440 = vpack.c.b16 %v431, %v430
    %v441 = vpack.c.b16 %v433, %v432
    %450 = vmatprep.subr.bf16.mxu0 0
    %451 = vmatpush1.bf16.msra.mxu0 %v441
    %452 = vmatprep.subr.bf16.mxu0 0
    %453 = vmatpush1.bf16.msra.mxu0 %v440
    %454 = vmatprep.subr.bf16.mxu0 0
    %455 = vmatpush1.bf16.msra.mxu0 %v439
    %456 = vmatprep.subr.bf16.mxu0 0
    %457 = vmatpush1.bf16.msra.mxu0 %v438
    %458 = vmatprep.subr.bf16.mxu0 0
    %459 = vmatpush1.bf16.msra.mxu0 %v437
    %460 = vmatprep.subr.bf16.mxu0 0
    %461 = vmatpush1.bf16.msra.mxu0 %v436
    %462 = vmatprep.subr.bf16.mxu0 0
    %463 = vmatpush1.bf16.msra.mxu0 %v435
    %464 = vmatprep.subr.bf16.mxu0 0
    %465 = vmatpush1.bf16.msra.mxu0 %v434
    %466 = vmatprep.subr.bf16.mxu0 0
    %467 = vmatpush2.bf16.msra.mxu0 0
    %468 = vmatprep.subr.bf16.mxu0 0
    %469 = vmatpush2.bf16.msra.mxu0 0
    %470 = vmatprep.subr.bf16.mxu0 0
    %471 = vmatpush2.bf16.msra.mxu0 0
    %472 = vmatprep.subr.bf16.mxu0 0
    %473 = vmatpush2.bf16.msra.mxu0 0
    %474 = vmatprep.subr.bf16.mxu0 0
    %475 = vmatpush2.bf16.msra.mxu0 0
    %476 = vmatprep.subr.bf16.mxu0 0
    %477 = vmatpush2.bf16.msra.mxu0 0
    %478 = vmatprep.subr.bf16.mxu0 0
    %479 = vmatpush2.bf16.msra.mxu0 0
    %480 = vmatprep.subr.bf16.mxu0 0
    %481 = vmatpush2.bf16.msra.mxu0 0
    %482 = vmatprep.mubr.bf16.mxu0 0
    %483 = vmatmul.mubr.bf16.gmra.mxu0 %v397
    %v484 = vpop.f32.mrf.mxu0
    %v485 = vadd.f32 %v401, %v484
    %v486 = vpop.f32.mrf.mxu0
    %v487 = vpop.f32.mrf.mxu0
    %v488 = vpop.f32.mrf.mxu0
    %489 = vdwg.mxu0
    %v490 = vmul.f32 %v485, 0.2
    %v491 = vmax.f32 %v485, %v490
    %s492 = scalar_lea.vmem [#allocation4], 192
    %v493 = vld [vmem:[%s492] sm:$0xf]
    %v494 = vld [vmem:[%s492 + $0x4] sm:$0xf]
    %v495 = vld [vmem:[%s492 + $0x8] sm:$0xf]
    %v496 = vld [vmem:[%s492 + $0xc] sm:$0xf]
    %v497 = vld [vmem:[%s492 + $0x10] sm:$0xf]
    %v498 = vld [vmem:[%s492 + $0x14] sm:$0xf]
    %v499 = vld [vmem:[%s492 + $0x18] sm:$0xf]
    %v500 = vld [vmem:[%s492 + $0x1c] sm:$0xf]
    %v501 = vld [vmem:[%s492 + $0x20] sm:$0xf]
    %v502 = vld [vmem:[%s492 + $0x24] sm:$0xf]
    %v503 = vld [vmem:[%s492 + $0x28] sm:$0xf]
    %v504 = vld [vmem:[%s492 + $0x2c] sm:$0xf]
    %v505 = vld [vmem:[%s492 + $0x30] sm:$0xf]
    %v506 = vld [vmem:[%s492 + $0x34] sm:$0xf]
    %v507 = vld [vmem:[%s492 + $0x38] sm:$0xf]
    %v508 = vld [vmem:[%s492 + $0x3c] sm:$0xf]
    %v509 = vpack.c.bf16 %v491, %v491
    %v510 = vlaneseq
    %v511 = vshrl.u32 %v510, 7
    %v512 = vsub.s32 5, %v511
    %v513 = vrot.slane %v49, %v512
    %v530 = vunpack.c.l.b16 %v493
    %v531 = vunpack.c.l.b16 %v494
    %v532 = vunpack.c.l.b16 %v495
    %v533 = vunpack.c.l.b16 %v496
    %v534 = vunpack.c.l.b16 %v497
    %v535 = vunpack.c.l.b16 %v498
    %v536 = vunpack.c.l.b16 %v499
    %v537 = vunpack.c.l.b16 %v500
    %v538 = vunpack.c.l.b16 %v501
    %v539 = vunpack.c.l.b16 %v502
    %v540 = vunpack.c.l.b16 %v503
    %v541 = vunpack.c.l.b16 %v504
    %v542 = vunpack.c.l.b16 %v505
    %v543 = vunpack.c.l.b16 %v506
    %v544 = vunpack.c.l.b16 %v507
    %v545 = vunpack.c.l.b16 %v508
    %v546 = vpack.c.b16 %v531, %v530
    %v547 = vpack.c.b16 %v533, %v532
    %v548 = vpack.c.b16 %v535, %v534
    %v549 = vpack.c.b16 %v537, %v536
    %v550 = vpack.c.b16 %v539, %v538
    %v551 = vpack.c.b16 %v541, %v540
    %v552 = vpack.c.b16 %v543, %v542
    %v553 = vpack.c.b16 %v545, %v544
    %562 = vmatprep.subr.bf16.mxu0 0
    %563 = vmatpush1.bf16.msra.mxu0 %v553
    %564 = vmatprep.subr.bf16.mxu0 0
    %565 = vmatpush1.bf16.msra.mxu0 %v552
    %566 = vmatprep.subr.bf16.mxu0 0
    %567 = vmatpush1.bf16.msra.mxu0 %v551
    %568 = vmatprep.subr.bf16.mxu0 0
    %569 = vmatpush1.bf16.msra.mxu0 %v550
    %570 = vmatprep.subr.bf16.mxu0 0
    %571 = vmatpush1.bf16.msra.mxu0 %v549
    %572 = vmatprep.subr.bf16.mxu0 0
    %573 = vmatpush1.bf16.msra.mxu0 %v548
    %574 = vmatprep.subr.bf16.mxu0 0
    %575 = vmatpush1.bf16.msra.mxu0 %v547
    %576 = vmatprep.subr.bf16.mxu0 0
    %577 = vmatpush1.bf16.msra.mxu0 %v546
    %578 = vmatprep.subr.bf16.mxu0 0
    %579 = vmatpush2.bf16.msra.mxu0 0
    %580 = vmatprep.subr.bf16.mxu0 0
    %581 = vmatpush2.bf16.msra.mxu0 0
    %582 = vmatprep.subr.bf16.mxu0 0
    %583 = vmatpush2.bf16.msra.mxu0 0
    %584 = vmatprep.subr.bf16.mxu0 0
    %585 = vmatpush2.bf16.msra.mxu0 0
    %586 = vmatprep.subr.bf16.mxu0 0
    %587 = vmatpush2.bf16.msra.mxu0 0
    %588 = vmatprep.subr.bf16.mxu0 0
    %589 = vmatpush2.bf16.msra.mxu0 0
    %590 = vmatprep.subr.bf16.mxu0 0
    %591 = vmatpush2.bf16.msra.mxu0 0
    %592 = vmatprep.subr.bf16.mxu0 0
    %593 = vmatpush2.bf16.msra.mxu0 0
    %594 = vmatprep.mubr.bf16.mxu0 0
    %595 = vmatmul.mubr.bf16.gmra.mxu0 %v509
    %v596 = vpop.f32.mrf.mxu0
    %v597 = vadd.f32 %v513, %v596
    %v598 = vpop.f32.mrf.mxu0
    %v599 = vpop.f32.mrf.mxu0
    %v600 = vpop.f32.mrf.mxu0
    %601 = vdwg.mxu0
    %v602 = vmul.f32 %v597, 0.2
    %v603 = vmax.f32 %v597, %v602
    %s604 = scalar_lea.vmem [#allocation4], 256
    %v605 = vld [vmem:[%s604] sm:$0xf]
    %v606 = vld [vmem:[%s604 + $0x4] sm:$0xf]
    %v607 = vld [vmem:[%s604 + $0x8] sm:$0xf]
    %v608 = vld [vmem:[%s604 + $0xc] sm:$0xf]
    %v609 = vld [vmem:[%s604 + $0x10] sm:$0xf]
    %v610 = vld [vmem:[%s604 + $0x14] sm:$0xf]
    %v611 = vld [vmem:[%s604 + $0x18] sm:$0xf]
    %v612 = vld [vmem:[%s604 + $0x1c] sm:$0xf]
    %v613 = vld [vmem:[%s604 + $0x20] sm:$0xf]
    %v614 = vld [vmem:[%s604 + $0x24] sm:$0xf]
    %v615 = vld [vmem:[%s604 + $0x28] sm:$0xf]
    %v616 = vld [vmem:[%s604 + $0x2c] sm:$0xf]
    %v617 = vld [vmem:[%s604 + $0x30] sm:$0xf]
    %v618 = vld [vmem:[%s604 + $0x34] sm:$0xf]
    %v619 = vld [vmem:[%s604 + $0x38] sm:$0xf]
    %v620 = vld [vmem:[%s604 + $0x3c] sm:$0xf]
    %v621 = vpack.c.bf16 %v603, %v603
    %v622 = vlaneseq
    %v623 = vshrl.u32 %v622, 7
    %v624 = vsub.s32 6, %v623
    %v625 = vrot.slane %v49, %v624
    %v642 = vunpack.c.l.b16 %v605
    %v643 = vunpack.c.l.b16 %v606
    %v644 = vunpack.c.l.b16 %v607
    %v645 = vunpack.c.l.b16 %v608
    %v646 = vunpack.c.l.b16 %v609
    %v647 = vunpack.c.l.b16 %v610
    %v648 = vunpack.c.l.b16 %v611
    %v649 = vunpack.c.l.b16 %v612
    %v650 = vunpack.c.l.b16 %v613
    %v651 = vunpack.c.l.b16 %v614
    %v652 = vunpack.c.l.b16 %v615
    %v653 = vunpack.c.l.b16 %v616
    %v654 = vunpack.c.l.b16 %v617
    %v655 = vunpack.c.l.b16 %v618
    %v656 = vunpack.c.l.b16 %v619
    %v657 = vunpack.c.l.b16 %v620
    %v658 = vpack.c.b16 %v643, %v642
    %v659 = vpack.c.b16 %v645, %v644
    %v660 = vpack.c.b16 %v647, %v646
    %v661 = vpack.c.b16 %v649, %v648
    %v662 = vpack.c.b16 %v651, %v650
    %v663 = vpack.c.b16 %v653, %v652
    %v664 = vpack.c.b16 %v655, %v654
    %v665 = vpack.c.b16 %v657, %v656
    %674 = vmatprep.subr.bf16.mxu0 0
    %675 = vmatpush1.bf16.msra.mxu0 %v665
    %676 = vmatprep.subr.bf16.mxu0 0
    %677 = vmatpush1.bf16.msra.mxu0 %v664
    %678 = vmatprep.subr.bf16.mxu0 0
    %679 = vmatpush1.bf16.msra.mxu0 %v663
    %680 = vmatprep.subr.bf16.mxu0 0
    %681 = vmatpush1.bf16.msra.mxu0 %v662
    %682 = vmatprep.subr.bf16.mxu0 0
    %683 = vmatpush1.bf16.msra.mxu0 %v661
    %684 = vmatprep.subr.bf16.mxu0 0
    %685 = vmatpush1.bf16.msra.mxu0 %v660
    %686 = vmatprep.subr.bf16.mxu0 0
    %687 = vmatpush1.bf16.msra.mxu0 %v659
    %688 = vmatprep.subr.bf16.mxu0 0
    %689 = vmatpush1.bf16.msra.mxu0 %v658
    %690 = vmatprep.subr.bf16.mxu0 0
    %691 = vmatpush2.bf16.msra.mxu0 0
    %692 = vmatprep.subr.bf16.mxu0 0
    %693 = vmatpush2.bf16.msra.mxu0 0
    %694 = vmatprep.subr.bf16.mxu0 0
    %695 = vmatpush2.bf16.msra.mxu0 0
    %696 = vmatprep.subr.bf16.mxu0 0
    %697 = vmatpush2.bf16.msra.mxu0 0
    %698 = vmatprep.subr.bf16.mxu0 0
    %699 = vmatpush2.bf16.msra.mxu0 0
    %700 = vmatprep.subr.bf16.mxu0 0
    %701 = vmatpush2.bf16.msra.mxu0 0
    %702 = vmatprep.subr.bf16.mxu0 0
    %703 = vmatpush2.bf16.msra.mxu0 0
    %704 = vmatprep.subr.bf16.mxu0 0
    %705 = vmatpush2.bf16.msra.mxu0 0
    %706 = vmatprep.mubr.bf16.mxu0 0
    %707 = vmatmul.mubr.bf16.gmra.mxu0 %v621
    %v708 = vpop.f32.mrf.mxu0
    %v709 = vadd.f32 %v625, %v708
    %v710 = vpop.f32.mrf.mxu0
    %v711 = vpop.f32.mrf.mxu0
    %v712 = vpop.f32.mrf.mxu0
    %713 = vdwg.mxu0
    %714 = vst [vmem:[%s5] sm:$0x3] %v709
    // Predicated region
    $region30: #{forward.1} parent=1 // pred_check
      _
    $region31: #{forward.1} parent=1 // pred_check_branch
      %716 = sbr.rel (0) target = $region33
    $region32: #{forward.1} parent=1 // pred_region
      _
    $region33: #{forward.1} parent=1 // pred_fallthru
      _
    // Predicated region
    $region34: #{forward.1} parent=1 // pred_check
      _
    $region35: #{forward.1} parent=1 // pred_check_branch
      %718 = sbr.rel (0) target = $region37
    $region36: #{forward.1} parent=1 // pred_region
      _
    $region37: #{forward.1} parent=1 // pred_fallthru
      _
    %719 = vsyncpa [#allocation3], 1
    %720 = vsyncpa [#allocation5], 1

</llo_original>
